<compile_context>
chip_gen: v7x
topology: tpu7x:2x2x1
jax: 0.10.0
libtpu: 0.0.40
codegen_flags: <defaults>
</compile_context>

<pallas_src>
import functools

import jax
import jax.numpy as jnp
from jax.experimental import pallas as pl
from jax.experimental.pallas import tpu as pltpu

EPS = 1e-5


# --------------------------------------------------------------------------- #
# Kernels
# --------------------------------------------------------------------------- #
def _conv1_stats_kernel(x_ref, w1_ref, b1_ref, sum_ref, ssq_ref,
                        *, tile, n_valid, ragged):
    """Per-channel sum / sumsq of conv1 pre-BN activations, streamed over tiles."""
    b, t = pl.program_id(0), pl.program_id(1)

    @pl.when(jnp.logical_and(b == 0, t == 0))
    def _():
        sum_ref[...] = jnp.zeros_like(sum_ref)
        ssq_ref[...] = jnp.zeros_like(ssq_ref)

    h = jnp.dot(x_ref[0], w1_ref[...], preferred_element_type=jnp.float32)
    h = h + b1_ref[...]
    if ragged:
        rows = jax.lax.broadcasted_iota(jnp.int32, (tile, 1), 0) + t * tile
        mf = (rows < n_valid).astype(jnp.float32)
        sum_ref[...] += jnp.sum(h * mf, axis=0, keepdims=True)
        ssq_ref[...] += jnp.sum(h * h * mf, axis=0, keepdims=True)
    else:
        sum_ref[...] += jnp.sum(h, axis=0, keepdims=True)
        ssq_ref[...] += jnp.sum(h * h, axis=0, keepdims=True)


def _conv2_stats_kernel(x_ref, w1_ref, b1_ref, w2_ref, b2_ref,
                        sum_ref, ssq_ref, *, compute_dtype, tile, n_valid, ragged):
    """conv1(+folded bn1)+relu, then conv2 pre-BN sum/sumsq, streamed over tiles."""
    b, t = pl.program_id(0), pl.program_id(1)

    @pl.when(jnp.logical_and(b == 0, t == 0))
    def _():
        sum_ref[...] = jnp.zeros_like(sum_ref)
        ssq_ref[...] = jnp.zeros_like(ssq_ref)

    h1 = jnp.dot(x_ref[0], w1_ref[...], preferred_element_type=jnp.float32)
    h1 = jnp.maximum(h1 + b1_ref[...], 0.0)
    h2 = jnp.dot(h1.astype(compute_dtype), w2_ref[...],
                 preferred_element_type=jnp.float32) + b2_ref[...]
    if ragged:
        rows = jax.lax.broadcasted_iota(jnp.int32, (tile, 1), 0) + t * tile
        mf = (rows < n_valid).astype(jnp.float32)
        sum_ref[...] += jnp.sum(h2 * mf, axis=0, keepdims=True)
        ssq_ref[...] += jnp.sum(h2 * h2 * mf, axis=0, keepdims=True)
    else:
        sum_ref[...] += jnp.sum(h2, axis=0, keepdims=True)
        ssq_ref[...] += jnp.sum(h2 * h2, axis=0, keepdims=True)


def _conv3_stats_pool_kernel(x_ref, w1_ref, b1_ref, w2_ref, b2_ref,
                             w3_ref, b3_ref,
                             sum_ref, ssq_ref, pmax_ref,
                             *, compute_dtype, tile, n_valid, ragged, chunk, sub):
    """conv1..conv3 (bn1/bn2 folded, sign(g3) pre-folded into w3/b3).

    Accumulates conv3 pre-BN sum (algebraic, on the MXU), sumsq and the
    per-batch running max of the sign-flipped pre-BN activations.
    """
    b, t = pl.program_id(1), pl.program_id(2)

    @pl.when(jnp.logical_and(b == 0, t == 0))
    def _():
        sum_ref[...] = jnp.zeros_like(sum_ref)
        ssq_ref[...] = jnp.zeros_like(ssq_ref)

    @pl.when(t == 0)
    def _():
        pmax_ref[...] = jnp.full_like(pmax_ref, -jnp.inf)

    h1 = jnp.dot(x_ref[0], w1_ref[...], preferred_element_type=jnp.float32)
    h1 = jnp.maximum(h1 + b1_ref[...], 0.0)
    h2 = jnp.dot(h1.astype(compute_dtype), w2_ref[...],
                 preferred_element_type=jnp.float32)
    h2 = jnp.maximum(h2 + b2_ref[...], 0.0)                 # (tile, 128) f32
    h2c = h2.astype(compute_dtype)

    if ragged:
        rows = jax.lax.broadcasted_iota(jnp.int32, (tile, 1), 0) + t * tile
        mask = rows < n_valid                                # (tile, 1) bool
        mf = mask.astype(jnp.float32)
        r2 = jnp.sum(h2 * mf, axis=0, keepdims=True)         # (1, 128) f32
        cnt = jnp.minimum(n_valid - t * tile, tile).astype(jnp.float32)
    else:
        mask = None
        mf = None
        r2 = jnp.sum(h2, axis=0, keepdims=True)
        cnt = float(tile)

    # Row-sum of conv3 pre-BN, computed algebraically as a matvec on the MXU:
    #   sum_rows(relu(h2) @ W3 + b3) == sum_rows(relu(h2)) @ W3 + n_rows * b3
    sum_ref[...] += (jnp.dot(r2.astype(compute_dtype), w3_ref[...],
                             preferred_element_type=jnp.float32)
                     + cnt * b3_ref[...])

    # 256-wide column sub-blocks: bound the f32 h3 live range and let the
    # ssq / max epilogue of sub-block s hide under the matmul of s + 1.
    for s in range(chunk // sub):
        lo, hi = s * sub, (s + 1) * sub
        h3 = jnp.dot(h2c, w3_ref[:, lo:hi],
                     preferred_element_type=jnp.float32) + b3_ref[:, lo:hi]
        if ragged:
            ssq_ref[:, lo:hi] += jnp.sum(h3 * h3 * mf, axis=0, keepdims=True)
            h3 = jnp.where(mask, h3, -jnp.inf)
        else:
            ssq_ref[:, lo:hi] += jnp.sum(h3 * h3, axis=0, keepdims=True)
        pmax_ref[0, :, lo:hi] = jnp.maximum(
            pmax_ref[0, :, lo:hi], jnp.max(h3, axis=0, keepdims=True))


def _fc_head_kernel(pmax_ref, sc3_ref, sh3_ref,
                    fw1_ref, fb1_ref, g4_ref, be4_ref,
                    fw2_ref, fb2_ref, g5_ref, be5_ref, fw3_ref, fb3_ref,
                    out_ref, *, compute_dtype):
    """pooled recovery + fc1->bn4->relu->fc2->bn5->relu->fc3 (+identity in fb3)."""
    # max_n relu(bn3(h3)) == relu(|sc3| * max_n(sign(g3)*h3) + sh3)
    pooled = jnp.maximum(pmax_ref[...] * sc3_ref[...] + sh3_ref[...], 0.0)

    def bn_relu(h, g, be):
        # Train-mode BatchNorm1d over the batch axis, folded into a single FMA.
        mu = jnp.mean(h, axis=0, keepdims=True)
        var = jnp.maximum(jnp.mean(h * h, axis=0, keepdims=True) - mu * mu, 0.0)
        scale = g * jax.lax.rsqrt(var + EPS)
        shift = be - mu * scale
        return jnp.maximum(h * scale + shift, 0.0)

    f = jnp.dot(pooled.astype(compute_dtype), fw1_ref[...],
                preferred_element_type=jnp.float32) + fb1_ref[...]
    f = bn_relu(f, g4_ref[...], be4_ref[...])
    f = jnp.dot(f.astype(compute_dtype), fw2_ref[...],
                preferred_element_type=jnp.float32) + fb2_ref[...]
    f = bn_relu(f, g5_ref[...], be5_ref[...])
    out_ref[...] = jnp.dot(f.astype(compute_dtype), fw3_ref[...],
                           preferred_element_type=jnp.float32) + fb3_ref[...]


# --------------------------------------------------------------------------- #
# Wrapper helpers
# --------------------------------------------------------------------------- #
def _full_spec(shape):
    return pl.BlockSpec(shape, lambda i, n=len(shape): (0,) * n)


def _round_up(x, m):
    return (x + m - 1) // m * m


def _choose_tiling(n, want):
    """Point-tile size (multiple of 8), padded point count and tile count."""
    tile = min(_round_up(max(want, 8), 8), _round_up(n, 8))
    n_pad = _round_up(n, tile)
    return tile, n_pad, n_pad // tile


def _bn_fold(s, ss, n_rows, gamma, beta):
    """Streaming batch-stat BN -> per-channel (scale, shift)."""
    mu = s / n_rows
    var = jnp.maximum(ss / n_rows - mu * mu, 0.0)
    scale = gamma * jax.lax.rsqrt(var + EPS)
    shift = beta - mu * scale
    return scale, shift


def _tpu_defaults():
    """(channel_split, vmem_limit_bytes) picked per TPU generation."""
    try:
        kind = jax.devices()[0].device_kind.lower()
    except Exception:  # pragma: no cover - CPU fallback / odd runtimes
        kind = ""
    is_v7 = "v7" in kind  # dual-TensorCore: shard conv3 channels across cores
    channel_split = 2 if is_v7 else 1
    vmem_limit = (48 if is_v7 else 64) * 1024 * 1024
    return channel_split, vmem_limit


def init_params(key):
    """Deterministic synthetic parameters with the STN3d shapes."""
    ks = jax.random.split(key, 16)

    def w(k, shape, scale):
        return scale * jax.random.normal(k, shape, dtype=jnp.float32)

    p = {}
    # conv weights stored already transposed: (Cin, Cout)
    p["w1"], p["b1"] = w(ks[0], (3, 64), 0.3), w(ks[1], (1, 64), 0.1)
    p["w2"], p["b2"] = w(ks[2], (64, 128), 0.1), w(ks[3], (1, 128), 0.1)
    p["w3"], p["b3"] = w(ks[4], (128, 1024), 0.05), w(ks[5], (1, 1024), 0.1)
    # fc weights stored transposed: (in, out)
    p["fw1"], p["fb1"] = w(ks[6], (1024, 512), 0.02), w(ks[7], (1, 512), 0.1)
    p["fw2"], p["fb2"] = w(ks[8], (512, 256), 0.03), w(ks[9], (1, 256), 0.1)
    p["fw3"], p["fb3"] = w(ks[10], (256, 9), 0.05), w(ks[11], (1, 9), 0.1)
    # BatchNorm affine params (non-trivial so the path is exercised)
    bk = jax.random.split(ks[12], 10)
    for i, c in enumerate([64, 128, 1024, 512, 256]):
        p[f"g{i + 1}"] = 1.0 + 0.1 * jax.random.normal(bk[2 * i], (1, c), jnp.float32)
        p[f"be{i + 1}"] = 0.1 * jax.random.normal(bk[2 * i + 1], (1, c), jnp.float32)
    return p


# --------------------------------------------------------------------------- #
# Forward pass
# --------------------------------------------------------------------------- #
def stn3d_forward(x, params, *, tile_n=2048, channel_split=None,
                  compute_dtype=jnp.bfloat16, vmem_limit_bytes=None):
    """x: (B, 3, N) float32 (PyTorch Conv1d NCW input).  Returns (B, 3, 3)."""
    B, C, N = x.shape
    assert C == 3
    f32 = jnp.float32
    cd = compute_dtype

    auto_split, auto_vmem = _tpu_defaults()
    if channel_split is None:
        channel_split = auto_split
    if vmem_limit_bytes is None:
        vmem_limit_bytes = auto_vmem

    tile, n_pad, nt = _choose_tiling(N, tile_n)
    ragged = (n_pad != N)
    assert 1024 % channel_split == 0
    chunk = 1024 // channel_split
    assert chunk % 128 == 0
    sub = min(256, chunk)
    n_rows = float(B * N)

    # Points-as-rows layout, channel-padded 3 -> 8, point-padded N -> n_pad.
    # Padded rows are masked out of all statistics / pooling inside the kernels.
    xp = jnp.transpose(x, (0, 2, 1))                                    # (B, N, 3)
    xp = jnp.pad(xp, ((0, 0), (0, n_pad - N), (0, 5))).astype(cd)       # (B, n_pad, 8)
    w1p = jnp.pad(params["w1"], ((0, 5), (0, 0)))                       # (8, 64) f32

    x_spec2 = pl.BlockSpec((1, tile, 8), lambda b, t: (b, t, 0))

    def const2(shape):
        return pl.BlockSpec(shape, lambda b, t, n=len(shape): (0,) * n)

    seq_params = pltpu.CompilerParams(
        dimension_semantics=("arbitrary", "arbitrary"),
        vmem_limit_bytes=vmem_limit_bytes)

    mask_kw = dict(tile=tile, n_valid=N, ragged=ragged)

    # ---- pass 1: conv1 pre-BN batch statistics ------------------------------
    s1, ss1 = pl.pallas_call(
        functools.partial(_conv1_stats_kernel, **mask_kw),
        grid=(B, nt),
        in_specs=[x_spec2, const2((8, 64)), const2((1, 64))],
        out_specs=[const2((1, 64)), const2((1, 64))],
        out_shape=[jax.ShapeDtypeStruct((1, 64), f32),
                   jax.ShapeDtypeStruct((1, 64), f32)],
        compiler_params=seq_params,
    )(xp, w1p.astype(cd), params["b1"])

    sc1, sh1 = _bn_fold(s1, ss1, n_rows, params["g1"], params["be1"])
    w1f = (w1p * sc1).astype(cd)            # bn1 folded into conv1
    b1f = params["b1"] * sc1 + sh1          # f32

    # ---- pass 2: conv2 pre-BN batch statistics ------------------------------
    s2, ss2 = pl.pallas_call(
        functools.partial(_conv2_stats_kernel, compute_dtype=cd, **mask_kw),
        grid=(B, nt),
        in_specs=[x_spec2, const2((8, 64)), const2((1, 64)),
                  const2((64, 128)), const2((1, 128))],
        out_specs=[const2((1, 128)), const2((1, 128))],
        out_shape=[jax.ShapeDtypeStruct((1, 128), f32),
                   jax.ShapeDtypeStruct((1, 128), f32)],
        compiler_params=seq_params,
    )(xp, w1f, b1f, params["w2"].astype(cd), params["b2"])

    sc2, sh2 = _bn_fold(s2, ss2, n_rows, params["g2"], params["be2"])
    w2f = (params["w2"] * sc2).astype(cd)   # bn2 folded into conv2
    b2f = params["b2"] * sc2 + sh2          # f32

    # ---- pass 3: conv3 stats + per-batch running max ------------------------
    # sign(bn3 scale) == sign(gamma3); fold it into w3/b3 so only a running max
    # is needed (pooled = relu(|sc3| * pmax + sh3), exactly).
    sign3 = jnp.where(params["g3"] >= 0.0, 1.0, -1.0)                   # (1, 1024)
    w3s = (params["w3"] * sign3).astype(cd)
    b3s = params["b3"] * sign3

    x_spec3 = pl.BlockSpec((1, tile, 8), lambda ct, b, t: (b, t, 0))

    def const3(shape):
        return pl.BlockSpec(shape, lambda ct, b, t, n=len(shape): (0,) * n)

    s3, ss3, pmax = pl.pallas_call(
        functools.partial(_conv3_stats_pool_kernel, compute_dtype=cd,
                          chunk=chunk, sub=sub, **mask_kw),
        grid=(channel_split, B, nt),
        in_specs=[x_spec3, const3((8, 64)), const3((1, 64)),
                  const3((64, 128)), const3((1, 128)),
                  pl.BlockSpec((128, chunk), lambda ct, b, t: (0, ct)),
                  pl.BlockSpec((1, chunk), lambda ct, b, t: (0, ct))],
        out_specs=[pl.BlockSpec((1, chunk), lambda ct, b, t: (0, ct)),
                   pl.BlockSpec((1, chunk), lambda ct, b, t: (0, ct)),
                   pl.BlockSpec((1, 1, chunk), lambda ct, b, t: (b, 0, ct))],
        out_shape=[jax.ShapeDtypeStruct((1, 1024), f32),
                   jax.ShapeDtypeStruct((1, 1024), f32),
                   jax.ShapeDtypeStruct((B, 1, 1024), f32)],
        compiler_params=pltpu.CompilerParams(
            # channel axis = independent work -> megacore-shardable on dual-TC
            dimension_semantics=("parallel", "arbitrary", "arbitrary"),
            vmem_limit_bytes=vmem_limit_bytes),
    )(xp, w1f, b1f, w2f, b2f, w3s, b3s)

    # BN3 fold on the sign-flipped stats: var is sign-invariant and |gamma|
    # reproduces exactly the same shift, so pooled = relu(sc3*pmax + sh3).
    sc3, sh3 = _bn_fold(s3, ss3, n_rows, jnp.abs(params["g3"]), params["be3"])

    # ---- FC head: pooled recovery + fc1/bn4/relu + fc2/bn5/relu + fc3 -------
    iden = jnp.eye(3, dtype=f32).reshape(1, 9)
    fc_args = [
        pmax.reshape(B, 1024), sc3, sh3,
        params["fw1"].astype(cd), params["fb1"], params["g4"], params["be4"],
        params["fw2"].astype(cd), params["fb2"], params["g5"], params["be5"],
        params["fw3"].astype(cd), params["fb3"] + iden,
    ]
    out = pl.pallas_call(
        functools.partial(_fc_head_kernel, compute_dtype=cd),
        grid=(1,),
        in_specs=[_full_spec(a.shape) for a in fc_args],
        out_specs=pl.BlockSpec((B, 9), lambda i: (0, 0)),
        out_shape=jax.ShapeDtypeStruct((B, 9), f32),
        compiler_params=pltpu.CompilerParams(
            dimension_semantics=("arbitrary",),
            vmem_limit_bytes=vmem_limit_bytes),
    )(*fc_args)
    return out.reshape(B, 3, 3)


# --------------------------------------------------------------------------- #
# Pure-JAX reference (train-mode BN, identical semantics) for validation
# --------------------------------------------------------------------------- #
def stn3d_reference(x, params):
    B, _, N = x.shape
    h = jnp.transpose(x, (0, 2, 1)).reshape(B * N, 3)

    def bn_relu(h, g, be):
        mu = jnp.mean(h, axis=0, keepdims=True)
        var = jnp.mean((h - mu) ** 2, axis=0, keepdims=True)
        return jnp.maximum((h - mu) / jnp.sqrt(var + EPS) * g + be, 0.0)

    h = bn_relu(h @ params["w1"] + params["b1"], params["g1"], params["be1"])
    h = bn_relu(h @ params["w2"] + params["b2"], params["g2"], params["be2"])
    h = bn_relu(h @ params["w3"] + params["b3"], params["g3"], params["be3"])
    g = jnp.max(h.reshape(B, N, 1024), axis=1)
    f = bn_relu(g @ params["fw1"] + params["fb1"], params["g4"], params["be4"])
    f = bn_relu(f @ params["fw2"] + params["fb2"], params["g5"], params["be5"])
    f = f @ params["fw3"] + params["fb3"] + jnp.eye(3, dtype=jnp.float32).reshape(1, 9)
    return f.reshape(B, 3, 3)


if __name__ == "__main__":
    key = jax.random.PRNGKey(0)
    kx, kp, kr = jax.random.split(key, 3)

    B, N = 8, 128
    x = jax.random.normal(kx, (B, 3, N), dtype=jnp.float32)
    params = init_params(kp)

    ref = jax.block_until_ready(stn3d_reference(x, params))

    # Exact-math path (f32 matmuls), aligned N with two point tiles; exercise
    # both the unsplit (chunk=1024, 4 sub-blocks) and split (chunk=512) conv3.
    for split in (1, 2):
        out_f32 = jax.block_until_ready(
            stn3d_forward(x, params, tile_n=64, channel_split=split,
                          compute_dtype=jnp.float32))
        assert out_f32.shape == (B, 3, 3) and out_f32.dtype == jnp.float32
        err = float(jnp.max(jnp.abs(out_f32 - ref)))
        assert bool(jnp.allclose(out_f32, ref, atol=2e-3, rtol=2e-3)), err

    # Ragged N (not a multiple of the tile): padded rows must be masked out of
    # the BN statistics and the global max-pool.
    Nr = 100
    xr = jax.random.normal(kr, (B, 3, Nr), dtype=jnp.float32)
    ref_r = jax.block_until_ready(stn3d_reference(xr, params))
    out_r = jax.block_until_ready(
        stn3d_forward(xr, params, tile_n=64, channel_split=1,
                      compute_dtype=jnp.float32))
    err_r = float(jnp.max(jnp.abs(out_r - ref_r)))
    assert bool(jnp.allclose(out_r, ref_r, atol=2e-3, rtol=2e-3)), err_r

    # Fast path: all defaults (bf16 matmuls, generation-aware channel_split and
    # vmem budget, large tiles).  Train-mode BN over a toy batch amplifies dtype
    # noise arbitrarily, so only a sanity check here.
    out_bf16 = jax.block_until_ready(stn3d_forward(x, params))
    assert out_bf16.shape == (B, 3, 3)
    assert bool(jnp.all(jnp.isfinite(out_bf16)))

    print("KERNEL_OK")
</pallas_src>

<mosaic_0001>
module attributes {stable_mosaic.version = 11 : i64} {
  func.func @_conv1_stats_kernel(%arg0: i32, %arg1: i32, %arg2: memref<1x64x8xf32, #tpu.memory_space<vmem>>, %arg3: memref<8x64xf32, #tpu.memory_space<vmem>>, %arg4: memref<1x64xf32, #tpu.memory_space<vmem>>, %arg5: memref<1x64xf32, #tpu.memory_space<vmem>>, %arg6: memref<1x64xf32, #tpu.memory_space<vmem>>) attributes {dimension_semantics = [#tpu.dimension_semantics<arbitrary>, #tpu.dimension_semantics<arbitrary>], iteration_bounds = array<i64: 8, 2>, scalar_prefetch = 0 : i64, scratch_operands = 0 : i64, tpu.core_type = #tpu.core_type<tc>, window_params = [{transform_indices = @transform_0, window_bounds = array<i64: 1, 64, 8>}, {pipeline_mode = #tpu.pipeline_mode<synchronous>, transform_indices = @transform_1, window_bounds = array<i64: 8, 64>}, {pipeline_mode = #tpu.pipeline_mode<synchronous>, transform_indices = @transform_2, window_bounds = array<i64: 1, 64>}, {pipeline_mode = #tpu.pipeline_mode<synchronous>, transform_indices = @transform_3, window_bounds = array<i64: 1, 64>}, {pipeline_mode = #tpu.pipeline_mode<synchronous>, transform_indices = @transform_4, window_bounds = array<i64: 1, 64>}]} {
    %c0_i32 = arith.constant 0 : i32
    %0 = arith.cmpi eq, %arg0, %c0_i32 : i32
    %c0_i32_0 = arith.constant 0 : i32
    %1 = arith.cmpi eq, %arg1, %c0_i32_0 : i32
    %2 = arith.andi %0, %1 : i1
    %3 = arith.extui %2 : i1 to i32
    %c0_i32_1 = arith.constant 0 : i32
    %4 = arith.cmpi ne, %3, %c0_i32_1 : i32
    scf.if %4 {
      %cst_18 = arith.constant 0.000000e+00 : f32
      %23 = vector.broadcast %cst_18 : f32 to vector<1x64xf32>
      %c0_19 = arith.constant 0 : index
      %c0_20 = arith.constant 0 : index
      %24 = vector.load %arg5[%c0_19, %c0_20] : memref<1x64xf32, #tpu.memory_space<vmem>>, vector<1x64xf32>
      tpu.vector_store %arg5[%c0_19, %c0_20], %23 {strides = array<i32>} : memref<1x64xf32, #tpu.memory_space<vmem>>, vector<1x64xf32>,
      %cst_21 = arith.constant 0.000000e+00 : f32
      %25 = vector.broadcast %cst_21 : f32 to vector<1x64xf32>
      %c0_22 = arith.constant 0 : index
      %c0_23 = arith.constant 0 : index
      %26 = vector.load %arg6[%c0_22, %c0_23] : memref<1x64xf32, #tpu.memory_space<vmem>>, vector<1x64xf32>
      tpu.vector_store %arg6[%c0_22, %c0_23], %25 {strides = array<i32>} : memref<1x64xf32, #tpu.memory_space<vmem>>, vector<1x64xf32>,
    } else {
    }
    %c0 = arith.constant 0 : index
    %c0_2 = arith.constant 0 : index
    %c0_3 = arith.constant 0 : index
    %5 = vector.load %arg2[%c0, %c0_2, %c0_3] : memref<1x64x8xf32, #tpu.memory_space<vmem>>, vector<1x64x8xf32>
    %6 = vector.shape_cast %5 : vector<1x64x8xf32> to vector<64x8xf32>
    %c0_4 = arith.constant 0 : index
    %c0_5 = arith.constant 0 : index
    %7 = vector.load %arg3[%c0_4, %c0_5] : memref<8x64xf32, #tpu.memory_space<vmem>>, vector<8x64xf32>
    %cst = arith.constant dense<0.000000e+00> : vector<64x64xf32>
    %8 = tpu.matmul %6, %7, %cst {dimension_numbers = #tpu.dot_dimension_numbers<[1], [0], [0], [1], [0, 0, 1, 1], [], []>} : vector<64x8xf32>, vector<8x64xf32>, vector<64x64xf32> -> vector<64x64xf32>
    %c0_6 = arith.constant 0 : index
    %c0_7 = arith.constant 0 : index
    %9 = vector.load %arg4[%c0_6, %c0_7] : memref<1x64xf32, #tpu.memory_space<vmem>>, vector<1x64xf32>
    %10 = vector.broadcast %9 : vector<1x64xf32> to vector<64x64xf32>
    %11 = arith.addf %8, %10 : vector<64x64xf32>
    %c0_8 = arith.constant 0 : index
    %c0_9 = arith.constant 0 : index
    %12 = vector.load %arg5[%c0_8, %c0_9] : memref<1x64xf32, #tpu.memory_space<vmem>>, vector<1x64xf32>
    %cst_10 = arith.constant dense<0.000000e+00> : vector<64xf32>
    %13 = vector.multi_reduction <add>, %11, %cst_10 [0] : vector<64x64xf32> to vector<64xf32>
    %14 = vector.shape_cast %13 : vector<64xf32> to vector<1x64xf32>
    %15 = arith.addf %12, %14 : vector<1x64xf32>
    %c0_11 = arith.constant 0 : index
    %c0_12 = arith.constant 0 : index
    %16 = vector.load %arg5[%c0_11, %c0_12] : memref<1x64xf32, #tpu.memory_space<vmem>>, vector<1x64xf32>
    tpu.vector_store %arg5[%c0_11, %c0_12], %15 {strides = array<i32>} : memref<1x64xf32, #tpu.memory_space<vmem>>, vector<1x64xf32>,
    %c0_13 = arith.constant 0 : index
    %c0_14 = arith.constant 0 : index
    %17 = vector.load %arg6[%c0_13, %c0_14] : memref<1x64xf32, #tpu.memory_space<vmem>>, vector<1x64xf32>
    %18 = arith.mulf %11, %11 : vector<64x64xf32>
    %cst_15 = arith.constant dense<0.000000e+00> : vector<64xf32>
    %19 = vector.multi_reduction <add>, %18, %cst_15 [0] : vector<64x64xf32> to vector<64xf32>
    %20 = vector.shape_cast %19 : vector<64xf32> to vector<1x64xf32>
    %21 = arith.addf %17, %20 : vector<1x64xf32>
    %c0_16 = arith.constant 0 : index
    %c0_17 = arith.constant 0 : index
    %22 = vector.load %arg6[%c0_16, %c0_17] : memref<1x64xf32, #tpu.memory_space<vmem>>, vector<1x64xf32>
    tpu.vector_store %arg6[%c0_16, %c0_17], %21 {strides = array<i32>} : memref<1x64xf32, #tpu.memory_space<vmem>>, vector<1x64xf32>,
    return
  }
  func.func @transform_0(%arg0: i32, %arg1: i32) -> (i32, i32, i32) {
    %c0_i32 = arith.constant 0 : i32
    %c0_i32_0 = arith.constant 0 : i32
    return %arg0, %arg1, %c0_i32 : i32, i32, i32
  }
  func.func @transform_1(%arg0: i32, %arg1: i32) -> (i32, i32) {
    %c0_i32 = arith.constant 0 : i32
    %c0_i32_0 = arith.constant 0 : i32
    %c0_i32_1 = arith.constant 0 : i32
    return %c0_i32, %c0_i32_0 : i32, i32
  }
  func.func @transform_2(%arg0: i32, %arg1: i32) -> (i32, i32) {
    %c0_i32 = arith.constant 0 : i32
    %c0_i32_0 = arith.constant 0 : i32
    %c0_i32_1 = arith.constant 0 : i32
    return %c0_i32, %c0_i32_0 : i32, i32
  }
  func.func @transform_3(%arg0: i32, %arg1: i32) -> (i32, i32) {
    %c0_i32 = arith.constant 0 : i32
    %c0_i32_0 = arith.constant 0 : i32
    %c0_i32_1 = arith.constant 0 : i32
    return %c0_i32, %c0_i32_0 : i32, i32
  }
  func.func @transform_4(%arg0: i32, %arg1: i32) -> (i32, i32) {
    %c0_i32 = arith.constant 0 : i32
    %c0_i32_0 = arith.constant 0 : i32
    %c0_i32_1 = arith.constant 0 : i32
    return %c0_i32, %c0_i32_0 : i32, i32
  }
}

</mosaic_0001>

<llo_original>
// kernel: tpu_custom_call.1
$region0: #{tpu_custom_call.1}
  #allocation0 [shape = 'u32[]', space=smem, size = 0x4, offset = 0x4, fixed_abs, tag = 'smem constant byte address 0x4 - core index']
  #allocation1 [shape = 'u32[144,128]{1,0:T(1,128)}', space=vmem, size = 0x12000, scoped, tag = 'internal scratch']
  %s0 = inlined_call_operand.hbm [shape: f32[8,128,8], index: 0, kind: input, shape index: {}]
  %s1 = inlined_call_operand.hbm [shape: f32[8,64], index: 1, kind: input, shape index: {}]
  %s2 = inlined_call_operand.hbm [shape: f32[1,64], index: 2, kind: input, shape index: {}]
  %s3 = inlined_call_operand.hbm [shape: f32[1,64], index: 3, kind: output, shape index: {0}]
  %s4 = inlined_call_operand.hbm [shape: f32[1,64], index: 4, kind: output, shape index: {1}]
  %5 = xla_tuple %s3, %s4
  %s6 = sld [smem:[#allocation0]]
  $region69: #{tpu_custom_call.1} parent=0
    _
  %s8 = ssub.s32 1, %s6
  %s9 = scalar_select 0, %s8, %s6
  $region1: #{tpu_custom_call.1} parent=0
    #allocation2 [shape = 'u8[65536]{0}', space=vmem, size = 0x10000, scoped, tag = 'input window, operand 0']
    #allocation3 [shape = 's32[2]{0}', space=sflag, size = 0x8, scoped, tag = 'scoped memory for tpu_custom_call.1']
    #allocation4 [shape = 's32[2]{0}', space=sflag, size = 0x8, scoped, tag = 'scoped memory for tpu_custom_call.1']
    #allocation5 [shape = 'u8[4096]{0}', space=vmem, size = 0x1000, scoped, tag = 'input window, operand 1, single buffered']
    #allocation6 [shape = 's32[1]{0}', space=sflag, size = 0x4, scoped, tag = 'scoped memory for tpu_custom_call.1']
    #allocation7 [shape = 'u8[512]{0}', space=vmem, size = 0x400, scoped, tag = 'input window, operand 2, single buffered']
    #allocation8 [shape = 'u8[512]{0}', space=vmem, size = 0x400, scoped, tag = 'output window, operand 0, single buffered']
    #allocation9 [shape = 'u8[512]{0}', space=vmem, size = 0x400, scoped, tag = 'output window, operand 1, single buffered']
    #allocation10 [shape = 's32[1]{0}', space=sflag, size = 0x4, scoped, tag = 'scoped memory for tpu_custom_call.1']
    %10 = vsyncpa [#allocation3], 0
    %s11 = scalar_lea.sflag [#allocation3], 1
    %12 = vsyncpa %s11, 0
    %13 = vsyncpa [#allocation6], 0
    %14 = vsyncpa [#allocation4], 0
    %15 = vsyncpa [#allocation10], 0
    loop: start=0, step=1, limit=18
    $region2: #{tpu_custom_call.1} parent=1 // loop_pre_header
      _
    $region3: #{tpu_custom_call.1} parent=1 // loop_header
      %s17 = sphi 0, %s21
      %p18 = scmp.ge.s32.totalorder %s17, 18
      %s24 = sphi 0, %s36
      %s25 = sphi 0, %s32
      %s26 = sphi 0, %s24
      %s27 = sphi 0, %s25
      %s28 = sphi 0, %s26
      %s29 = sphi 0, %s27
      %s41 = sphi 0, %s43
      %s44 = sphi 0, %s41
      %s45 = sphi 0, %s44
      %s61 = sphi 0, %s45
      %s65 = sphi 0, %s65
      %s67 = sphi 0, %s65
      %s68 = sphi 0, %s67
      %s82 = sphi 0, %s68
      %s86 = sphi 0, %s86
      %s88 = sphi 0, %s86
      %s89 = sphi 0, %s88
      %s103 = sphi 0, %s89
      %s107 = sphi 0, %s107
      %s109 = sphi 0, %s107
      %s110 = sphi 0, %s109
      %s124 = sphi 0, %s110
      %s128 = sphi 0, %s128
      %s130 = sphi 0, %s128
      %s131 = sphi 0, %s130
      %s145 = sphi 0, %s131
    $region4: #{tpu_custom_call.1} parent=1 // loop_header_branch
      %20 = sbr.rel (%p18) target = $region8
    $region5: #{tpu_custom_call.1} parent=1 // loop_body
      %s22 = ssub.s32 %s17, 1
      %s23 = ssub.s32 %s17, 2
      %s30 = sadd.s32 1, %s25
      %p31 = scmp.ge.s32.totalorder %s30, 2
      %s32 = scalar_select %p31, 0, %s30
      %s33 = sadd.s32 1, %s24
      %s34 = scalar_select %p31, %s33, %s24
      %p35 = scmp.ge.s32.totalorder %s34, 8
      %s36 = scalar_select %p35, 0, %s34
      %s37 = ssub.s32 %s24, %s36
      %s38 = ssub.s32 %s25, %s32
      %s39 = sor.u32 %s37, %s38
      %p40 = scmp.eq.s32.totalorder %s39, 0
      %s42 = sadd.s32 %s41, 1
      %s43 = scalar_select %p40, %s41, %s42
      %p46 = pneg %p40
      %p47 = scmp.eq.s32.totalorder %s17, 15
      %p48 = por %p46, %p47
      %p49 = scmp.ne.s32.totalorder %s41, %s44
      %p50 = scmp.eq.s32.totalorder %s17, 0
      %p51 = por %p49, %p50
      %p52 = scmp.ne.s32.totalorder %s41, %s44
      %p53 = scmp.eq.s32.totalorder %s22, 15
      %p54 = por %p52, %p53
      %p55 = scmp.ne.s32.totalorder %s44, %s45
      %p56 = scmp.eq.s32.totalorder %s22, 0
      %p57 = por %p55, %p56
      %p58 = scmp.ne.s32.totalorder %s44, %s45
      %p59 = scmp.eq.s32.totalorder %s23, 15
      %p60 = por %p58, %p59
      %p62 = scmp.ne.s32.totalorder %s45, %s61
      %p63 = scmp.eq.s32.totalorder %s23, 0
      %p64 = por %p62, %p63
      %s66 = sadd.s32 %s65, 1
      %p69 = scmp.eq.s32.totalorder %s17, 15
      %p70 = scmp.ne.s32.totalorder %s65, %s67
      %p71 = scmp.eq.s32.totalorder %s17, 0
      %p72 = por %p70, %p71
      %p73 = scmp.ne.s32.totalorder %s65, %s67
      %p74 = scmp.eq.s32.totalorder %s22, 15
      %p75 = por %p73, %p74
      %p76 = scmp.ne.s32.totalorder %s67, %s68
      %p77 = scmp.eq.s32.totalorder %s22, 0
      %p78 = por %p76, %p77
      %p79 = scmp.ne.s32.totalorder %s67, %s68
      %p80 = scmp.eq.s32.totalorder %s23, 15
      %p81 = por %p79, %p80
      %p83 = scmp.ne.s32.totalorder %s68, %s82
      %p84 = scmp.eq.s32.totalorder %s23, 0
      %p85 = por %p83, %p84
      %s87 = sadd.s32 %s86, 1
      %p90 = scmp.eq.s32.totalorder %s17, 15
      %p91 = scmp.ne.s32.totalorder %s86, %s88
      %p92 = scmp.eq.s32.totalorder %s17, 0
      %p93 = por %p91, %p92
      %p94 = scmp.ne.s32.totalorder %s86, %s88
      %p95 = scmp.eq.s32.totalorder %s22, 15
      %p96 = por %p94, %p95
      %p97 = scmp.ne.s32.totalorder %s88, %s89
      %p98 = scmp.eq.s32.totalorder %s22, 0
      %p99 = por %p97, %p98
      %p100 = scmp.ne.s32.totalorder %s88, %s89
      %p101 = scmp.eq.s32.totalorder %s23, 15
      %p102 = por %p100, %p101
      %p104 = scmp.ne.s32.totalorder %s89, %s103
      %p105 = scmp.eq.s32.totalorder %s23, 0
      %p106 = por %p104, %p105
      %s108 = sadd.s32 %s107, 1
      %p111 = scmp.eq.s32.totalorder %s17, 15
      %p112 = scmp.ne.s32.totalorder %s107, %s109
      %p113 = scmp.eq.s32.totalorder %s17, 0
      %p114 = por %p112, %p113
      %p115 = scmp.ne.s32.totalorder %s107, %s109
      %p116 = scmp.eq.s32.totalorder %s22, 15
      %p117 = por %p115, %p116
      %p118 = scmp.ne.s32.totalorder %s109, %s110
      %p119 = scmp.eq.s32.totalorder %s22, 0
      %p120 = por %p118, %p119
      %p121 = scmp.ne.s32.totalorder %s109, %s110
      %p122 = scmp.eq.s32.totalorder %s23, 15
      %p123 = por %p121, %p122
      %p125 = scmp.ne.s32.totalorder %s110, %s124
      %p126 = scmp.eq.s32.totalorder %s23, 0
      %p127 = por %p125, %p126
      %s129 = sadd.s32 %s128, 1
      %p132 = scmp.eq.s32.totalorder %s17, 15
      %p133 = scmp.ne.s32.totalorder %s128, %s130
      %p134 = scmp.eq.s32.totalorder %s17, 0
      %p135 = por %p133, %p134
      %p136 = scmp.ne.s32.totalorder %s128, %s130
      %p137 = scmp.eq.s32.totalorder %s22, 15
      %p138 = por %p136, %p137
      %p139 = scmp.ne.s32.totalorder %s130, %s131
      %p140 = scmp.eq.s32.totalorder %s22, 0
      %p141 = por %p139, %p140
      %p142 = scmp.ne.s32.totalorder %s130, %s131
      %p143 = scmp.eq.s32.totalorder %s23, 15
      %p144 = por %p142, %p143
      %p146 = scmp.ne.s32.totalorder %s131, %s145
      %p147 = scmp.eq.s32.totalorder %s23, 0
      %p148 = por %p146, %p147
      %p149 = scmp.le.s32.totalorder 1, %s17
      %p150 = scmp.lt.s32.totalorder %s17, 17
      %p151 = pnand %p149, %p150
      %p152 = pneg %p151
      // Predicated region
      $region9: #{tpu_custom_call.1} parent=5 // pred_check
        _
      $region10: #{tpu_custom_call.1} parent=5 // pred_check_branch
        %154 = sbr.rel (%p151) target = $region12
      $region11: #{tpu_custom_call.1} parent=5 // pred_region
        %s155 = ssub.s32 %s17, 1
        // Predicated region
        $region13: #{tpu_custom_call.1} parent=11 // pred_check
          %p156 = pneg %p78
        $region14: #{tpu_custom_call.1} parent=11 // pred_check_branch
          %158 = sbr.rel (%p156) target = $region16
        $region15: #{tpu_custom_call.1} parent=11 // pred_region
          %s160 = ssub.s32 128, 128
          %161 = vsyncadd [#allocation6], %s160
          %s163 = sshll.u32 [#allocation5], 4
          %s164 = int_to_ptr.vmem [resolvable:$true] %s163
          %166 = dma.hbm_to_vmem [thread:$0]  %s1, 128, %s164, [#allocation6]
        $region16: #{tpu_custom_call.1} parent=11 // pred_fallthru
          _
        // Predicated region
        $region17: #{tpu_custom_call.1} parent=11 // pred_check
          %p167 = pneg %p99
        $region18: #{tpu_custom_call.1} parent=11 // pred_check_branch
          %169 = sbr.rel (%p167) target = $region20
        $region19: #{tpu_custom_call.1} parent=11 // pred_region
          %s171 = ssub.s32 16, 16
          %172 = vsyncadd [#allocation6], %s171
          %s174 = sshll.u32 [#allocation7], 4
          %s175 = int_to_ptr.vmem [resolvable:$true] %s174
          %177 = dma.hbm_to_vmem [thread:$0]  %s2, 16, %s175, [#allocation6]
        $region20: #{tpu_custom_call.1} parent=11 // pred_fallthru
          _
      $region12: #{tpu_custom_call.1} parent=5 // pred_fallthru
        _
      %p178 = scmp.lt.s32.totalorder %s17, 16
      // Predicated region
      $region21: #{tpu_custom_call.1} parent=5 // pred_check
        %p179 = pneg %p178
      $region22: #{tpu_custom_call.1} parent=5 // pred_check_branch
        %181 = sbr.rel (%p179) target = $region24
      $region23: #{tpu_custom_call.1} parent=5 // pred_region
        // Predicated region
        $region25: #{tpu_custom_call.1} parent=23 // pred_check
          %p182 = pneg %p51
        $region26: #{tpu_custom_call.1} parent=23 // pred_check_branch
          %184 = sbr.rel (%p182) target = $region28
        $region27: #{tpu_custom_call.1} parent=23 // pred_region
          %s185 = sand.u32 %s41, 1
          %s186 = scalar_lea.sflag [#allocation3], %s185
          %s187 = sand.u32 %s41, 1
          %s188 = smul.addr %s187, 64
          %s189 = scalar_lea.vmem [#allocation2], %s188
          %s190 = smul.u32 8, %s25
          %s192 = ssub.s32 1024, 1024
          %193 = vsyncadd %s186, %s192
          %s194 = smul.addr %s24, 16
          %s195 = sadd.s32 %s190, %s194
          %s196 = smul.addr %s195, 128
          %s197 = scalar_lea.hbm %s0, %s196
          %s198 = sshll.u32 %s189, 4
          %s199 = int_to_ptr.vmem [resolvable:$true] %s198
          %204 = dma.hbm_to_vmem [thread:$0]  %s197, 1024, %s199, %s186, 128, 128, 8
        $region28: #{tpu_custom_call.1} parent=23 // pred_fallthru
          _
      $region24: #{tpu_custom_call.1} parent=5 // pred_fallthru
        _
      %p205 = scmp.le.s32.totalorder 1, %s17
      %p206 = scmp.lt.s32.totalorder %s17, 17
      %p207 = pnand %p205, %p206
      %p208 = pneg %p207
      // Predicated region
      $region29: #{tpu_custom_call.1} parent=5 // pred_check
        _
      $region30: #{tpu_custom_call.1} parent=5 // pred_check_branch
        %210 = sbr.rel (%p207) target = $region32
      $region31: #{tpu_custom_call.1} parent=5 // pred_region
        %s211 = ssub.s32 %s17, 1
        %s212 = sand.u32 %s44, 1
        %s213 = scalar_lea.sflag [#allocation3], %s212
        %s214 = sand.u32 %s44, 1
        %s215 = smul.addr %s214, 64
        %s216 = scalar_lea.vmem [#allocation2], %s215
        // Predicated region
        $region33: #{tpu_custom_call.1} parent=31 // pred_check
          %p217 = pneg %p57
        $region34: #{tpu_custom_call.1} parent=31 // pred_check_branch
          %219 = sbr.rel (%p217) target = $region36
        $region35: #{tpu_custom_call.1} parent=31 // pred_region
          %220 = dma.done %s213, 1024
        $region36: #{tpu_custom_call.1} parent=31 // pred_fallthru
          _
        // Predicated region
        $region37: #{tpu_custom_call.1} parent=31 // pred_check
          %p221 = pneg %p78
        $region38: #{tpu_custom_call.1} parent=31 // pred_check_branch
          %223 = sbr.rel (%p221) target = $region40
        $region39: #{tpu_custom_call.1} parent=31 // pred_region
          %224 = dma.done [#allocation6], 128
        $region40: #{tpu_custom_call.1} parent=31 // pred_fallthru
          _
        // Predicated region
        $region41: #{tpu_custom_call.1} parent=31 // pred_check
          %p225 = pneg %p99
        $region42: #{tpu_custom_call.1} parent=31 // pred_check_branch
          %227 = sbr.rel (%p225) target = $region44
        $region43: #{tpu_custom_call.1} parent=31 // pred_region
          %228 = dma.done [#allocation6], 16
        $region44: #{tpu_custom_call.1} parent=31 // pred_fallthru
          _
        %s229 = sand.u32 %s44, 1
        %s230 = scalar_lea.sflag [#allocation3], %s229
        %s231 = sand.u32 %s44, 1
        %s232 = smul.addr %s231, 64
        %s233 = scalar_lea.vmem [#allocation2], %s232
        %p234 = pneg %p57
        %p235 = pneg %p54
        %p236 = pneg %p78
        %p237 = pneg %p75
        %p238 = pneg %p99
        %p239 = pneg %p96
        %p240 = pneg %p120
        %p241 = pneg %p117
        %p242 = pneg %p141
        %p243 = pneg %p138
        %s244 = smul.u32 8, %s27
        %p245 = scmp.eq.s32.totalorder %s26, 0
        %p246 = scmp.eq.s32.totalorder %s27, 0
        %p247 = pnand %p245, %p246
        %p248 = pneg %p247
        // Predicated region
        $region45: #{tpu_custom_call.1} parent=31 // pred_check
          _
        $region46: #{tpu_custom_call.1} parent=31 // pred_check_branch
          %250 = sbr.rel (%p247) target = $region48
        $region47: #{tpu_custom_call.1} parent=31 // pred_region
          %vm251 = vcmask 516096
          %252 = vst.msk [vmem:[#allocation8] sm:$0x1] %vm251, 0.0
          %253 = vst.msk [vmem:[#allocation9] sm:$0x1] %vm251, 0.0
        $region48: #{tpu_custom_call.1} parent=31 // pred_fallthru
          _
        %v254 = vld [vmem:[%s216] sm:$0xff]
        %v255 = vld [vmem:[%s216 + $0x8] sm:$0xff]
        %v256 = vld [vmem:[%s216 + $0x10] sm:$0xff]
        %v257 = vld [vmem:[%s216 + $0x18] sm:$0xff]
        %v258 = vld [vmem:[%s216 + $0x20] sm:$0xff]
        %v259 = vld [vmem:[%s216 + $0x28] sm:$0xff]
        %v260 = vld [vmem:[%s216 + $0x30] sm:$0xff]
        %v261 = vld [vmem:[%s216 + $0x38] sm:$0xff]
        %v262 = vld [vmem:[#allocation5] sm:$0xff]
        %v263 = vld [vmem:[#allocation7] sm:$0x1]
        %v265 = vlaneseq
        %v266 = vshrl.u32 %v265, 7
        %v267 = vsub.s32 0, %v266
        %v268 = vrot.slane %v263, %v267
        %vm270 = vcmask 64512
        %v272 = vsel %vm270, %v254, 0
        %v275 = vsel %vm270, %v255, 0
        %v278 = vsel %vm270, %v256, 0
        %v281 = vsel %vm270, %v257, 0
        %v284 = vsel %vm270, %v258, 0
        %v287 = vsel %vm270, %v259, 0
        %v290 = vsel %vm270, %v260, 0
        %v293 = vsel %vm270, %v261, 0
        %295 = vmatprep.subr.mxu0 0.0
        %296 = vmatpush1.msra.mxu0 %v262
        %297 = vmatprep.subr.mxu0 0.0
        %298 = vmatpush1.msra.mxu0 0.0
        %299 = vmatprep.subr.mxu0 0.0
        %300 = vmatpush1.msra.mxu0 0.0
        %301 = vmatprep.subr.mxu0 0.0
        %302 = vmatpush1.msra.mxu0 0.0
        %303 = vmatprep.subr.mxu0 0.0
        %304 = vmatpush1.msra.mxu0 0.0
        %305 = vmatprep.subr.mxu0 0.0
        %306 = vmatpush1.msra.mxu0 0.0
        %307 = vmatprep.subr.mxu0 0.0
        %308 = vmatpush1.msra.mxu0 0.0
        %309 = vmatprep.subr.mxu0 0.0
        %310 = vmatpush1.msra.mxu0 0.0
        %311 = vmatprep.subr.mxu0 0.0
        %312 = vmatpush1.msra.mxu0 0.0
        %313 = vmatprep.subr.mxu0 0.0
        %314 = vmatpush1.msra.mxu0 0.0
        %315 = vmatprep.subr.mxu0 0.0
        %316 = vmatpush1.msra.mxu0 0.0
        %317 = vmatprep.subr.mxu0 0.0
        %318 = vmatpush1.msra.mxu0 0.0
        %319 = vmatprep.subr.mxu0 0.0
        %320 = vmatpush1.msra.mxu0 0.0
        %321 = vmatprep.subr.mxu0 0.0
        %322 = vmatpush1.msra.mxu0 0.0
        %323 = vmatprep.subr.mxu0 0.0
        %324 = vmatpush1.msra.mxu0 0.0
        %325 = vmatprep.subr.mxu0 0.0
        %326 = vmatpush1.msra.mxu0 0.0
        %327 = vmatprep.subr.mxu0 0.0
        %328 = vmatpush1.msra.mxu0 0.0
        %329 = vmatprep.subr.mxu0 0.0
        %330 = vmatpush1.msra.mxu0 0.0
        %331 = vmatprep.subr.mxu0 0.0
        %332 = vmatpush1.msra.mxu0 0.0
        %333 = vmatprep.subr.mxu0 0.0
        %334 = vmatpush1.msra.mxu0 0.0
        %335 = vmatprep.subr.mxu0 0.0
        %336 = vmatpush1.msra.mxu0 0.0
        %337 = vmatprep.subr.mxu0 0.0
        %338 = vmatpush1.msra.mxu0 0.0
        %339 = vmatprep.subr.mxu0 0.0
        %340 = vmatpush1.msra.mxu0 0.0
        %341 = vmatprep.subr.mxu0 0.0
        %342 = vmatpush1.msra.mxu0 0.0
        %343 = vmatprep.subr.mxu0 0.0
        %344 = vmatpush1.msra.mxu0 0.0
        %345 = vmatprep.subr.mxu0 0.0
        %346 = vmatpush1.msra.mxu0 0.0
        %347 = vmatprep.subr.mxu0 0.0
        %348 = vmatpush1.msra.mxu0 0.0
        %349 = vmatprep.subr.mxu0 0.0
        %350 = vmatpush1.msra.mxu0 0.0
        %351 = vmatprep.subr.mxu0 0.0
        %352 = vmatpush1.msra.mxu0 0.0
        %353 = vmatprep.subr.mxu0 0.0
        %354 = vmatpush1.msra.mxu0 0.0
        %355 = vmatprep.subr.mxu0 0.0
        %356 = vmatpush1.msra.mxu0 0.0
        %357 = vmatprep.subr.mxu0 0.0
        %358 = vmatpush1.msra.mxu0 0.0
        %359 = vmatprep.mubr.f32.mxu0 0.0
        %360 = vmatmul.mubr.f32.gmra.mrb[0].mxu0 %v272
        %v361 = vpop.f32.mrb[0].mxu0
        %v362 = vadd.f32 %v268, %v361
        %v363 = vpop.f32.mrb[0].mxu0
        %364 = vmatprep.mubr.f32.mxu0 0.0
        %365 = vmatmul.mubr.f32.gmra.mrb[0].mxu0 %v275
        %v366 = vpop.f32.mrb[0].mxu0
        %v367 = vadd.f32 %v268, %v366
        %v368 = vpop.f32.mrb[0].mxu0
        %369 = vmatprep.mubr.f32.mxu0 0.0
        %370 = vmatmul.mubr.f32.gmra.mrb[0].mxu0 %v278
        %v371 = vpop.f32.mrb[0].mxu0
        %v372 = vadd.f32 %v268, %v371
        %v373 = vpop.f32.mrb[0].mxu0
        %374 = vmatprep.mubr.f32.mxu0 0.0
        %375 = vmatmul.mubr.f32.gmra.mrb[0].mxu0 %v281
        %v376 = vpop.f32.mrb[0].mxu0
        %v377 = vadd.f32 %v268, %v376
        %v378 = vpop.f32.mrb[0].mxu0
        %379 = vmatprep.mubr.f32.mxu0 0.0
        %380 = vmatmul.mubr.f32.gmra.mrb[0].mxu0 %v284
        %v381 = vpop.f32.mrb[0].mxu0
        %v382 = vadd.f32 %v268, %v381
        %v383 = vpop.f32.mrb[0].mxu0
        %384 = vmatprep.mubr.f32.mxu0 0.0
        %385 = vmatmul.mubr.f32.gmra.mrb[0].mxu0 %v287
        %v386 = vpop.f32.mrb[0].mxu0
        %v387 = vadd.f32 %v268, %v386
        %v388 = vpop.f32.mrb[0].mxu0
        %389 = vmatprep.mubr.f32.mxu0 0.0
        %390 = vmatmul.mubr.f32.gmra.mrb[0].mxu0 %v290
        %v391 = vpop.f32.mrb[0].mxu0
        %v392 = vadd.f32 %v268, %v391
        %v393 = vpop.f32.mrb[0].mxu0
        %394 = vmatprep.mubr.f32.mxu0 0.0
        %395 = vmatmul.mubr.f32.gmra.mrb[0].mxu0 %v293
        %v396 = vpop.f32.mrb[0].mxu0
        %v397 = vadd.f32 %v268, %v396
        %v398 = vpop.f32.mrb[0].mxu0
        %399 = vdwg.mxu0
        %v400 = vld [vmem:[#allocation8] sm:$0x1]
        %vm401 = vcmask 523264
        %v402 = vsel %vm401, %v362, 0.0
        %v403 = vsel %vm401, %v367, 0.0
        %v404 = vadd.f32 %v402, %v403
        %v405 = vsel %vm401, %v372, 0.0
        %v406 = vadd.f32 %v404, %v405
        %v407 = vsel %vm401, %v377, 0.0
        %v408 = vadd.f32 %v406, %v407
        %v409 = vsel %vm401, %v382, 0.0
        %v410 = vadd.f32 %v408, %v409
        %v411 = vsel %vm401, %v387, 0.0
        %v412 = vadd.f32 %v410, %v411
        %v413 = vsel %vm401, %v392, 0.0
        %v414 = vadd.f32 %v412, %v413
        %v415 = vsel %vm401, %v397, 0.0
        %v416 = vadd.f32 %v414, %v415
        %v417 = vrot.slane %v416, 4
        %v418 = vadd.f32 %v416, %v417
        %v419 = vrot.slane %v418, 2
        %v420 = vadd.f32 %v418, %v419
        %v421 = vrot.slane %v420, 1
        %v422 = vadd.f32 %v420, %v421
        %v423 = vadd.f32 %v400, %v422
        %vm424 = vcmask 516096
        %425 = vst.msk [vmem:[#allocation8] sm:$0x1] %vm424, %v423
        %v426 = vld [vmem:[#allocation9] sm:$0x1]
        %v427 = vmul.f32 %v362, %v362
        %v428 = vmul.f32 %v367, %v367
        %v429 = vmul.f32 %v372, %v372
        %v430 = vmul.f32 %v377, %v377
        %v431 = vmul.f32 %v382, %v382
        %v432 = vmul.f32 %v387, %v387
        %v433 = vmul.f32 %v392, %v392
        %v434 = vmul.f32 %v397, %v397
        %v435 = vsel %vm401, %v427, 0.0
        %v436 = vsel %vm401, %v428, 0.0
        %v437 = vadd.f32 %v435, %v436
        %v438 = vsel %vm401, %v429, 0.0
        %v439 = vadd.f32 %v437, %v438
        %v440 = vsel %vm401, %v430, 0.0
        %v441 = vadd.f32 %v439, %v440
        %v442 = vsel %vm401, %v431, 0.0
        %v443 = vadd.f32 %v441, %v442
        %v444 = vsel %vm401, %v432, 0.0
        %v445 = vadd.f32 %v443, %v444
        %v446 = vsel %vm401, %v433, 0.0
        %v447 = vadd.f32 %v445, %v446
        %v448 = vsel %vm401, %v434, 0.0
        %v449 = vadd.f32 %v447, %v448
        %v450 = vrot.slane %v449, 4
        %v451 = vadd.f32 %v449, %v450
        %v452 = vrot.slane %v451, 2
        %v453 = vadd.f32 %v451, %v452
        %v454 = vrot.slane %v453, 1
        %v455 = vadd.f32 %v453, %v454
        %v456 = vadd.f32 %v426, %v455
        %457 = vst.msk [vmem:[#allocation9] sm:$0x1] %vm424, %v456
        // Predicated region
        $region49: #{tpu_custom_call.1} parent=31 // pred_check
          %p458 = pneg %p117
        $region50: #{tpu_custom_call.1} parent=31 // pred_check_branch
          %460 = sbr.rel (%p458) target = $region52
        $region51: #{tpu_custom_call.1} parent=31 // pred_region
          %s462 = ssub.s32 16, 16
          %463 = vsyncadd [#allocation4], %s462
          %s465 = sshll.u32 [#allocation8], 4
          %s466 = int_to_ptr.vmem [resolvable:$true] %s465
          %468 = dma.vmem_to_hbm [thread:$0]  %s466, 16, %s3, [#allocation4]
        $region52: #{tpu_custom_call.1} parent=31 // pred_fallthru
          _
        // Predicated region
        $region53: #{tpu_custom_call.1} parent=31 // pred_check
          %p469 = pneg %p138
        $region54: #{tpu_custom_call.1} parent=31 // pred_check_branch
          %471 = sbr.rel (%p469) target = $region56
        $region55: #{tpu_custom_call.1} parent=31 // pred_region
          %s473 = ssub.s32 16, 16
          %474 = vsyncadd [#allocation10], %s473
          %s476 = sshll.u32 [#allocation9], 4
          %s477 = int_to_ptr.vmem [resolvable:$true] %s476
          %479 = dma.vmem_to_hbm [thread:$0]  %s477, 16, %s4, [#allocation10]
        $region56: #{tpu_custom_call.1} parent=31 // pred_fallthru
          _
        // Predicated region
        $region57: #{tpu_custom_call.1} parent=31 // pred_check
          %p480 = pneg %p117
        $region58: #{tpu_custom_call.1} parent=31 // pred_check_branch
          %482 = sbr.rel (%p480) target = $region60
        $region59: #{tpu_custom_call.1} parent=31 // pred_region
          %483 = dma.done [#allocation4], 16
        $region60: #{tpu_custom_call.1} parent=31 // pred_fallthru
          _
        // Predicated region
        $region61: #{tpu_custom_call.1} parent=31 // pred_check
          %p484 = pneg %p138
        $region62: #{tpu_custom_call.1} parent=31 // pred_check_branch
          %486 = sbr.rel (%p484) target = $region64
        $region63: #{tpu_custom_call.1} parent=31 // pred_region
          %487 = dma.done [#allocation10], 16
        $region64: #{tpu_custom_call.1} parent=31 // pred_fallthru
          _
      $region32: #{tpu_custom_call.1} parent=5 // pred_fallthru
        _
      %p488 = scmp.le.s32.totalorder 2, %s17
      // Predicated region
      $region65: #{tpu_custom_call.1} parent=5 // pred_check
        %p489 = pneg %p488
      $region66: #{tpu_custom_call.1} parent=5 // pred_check_branch
        %491 = sbr.rel (%p489) target = $region68
      $region67: #{tpu_custom_call.1} parent=5 // pred_region
        %s492 = ssub.s32 %s17, 2
      $region68: #{tpu_custom_call.1} parent=5 // pred_fallthru
        _
    $region6: #{tpu_custom_call.1} parent=1 // loop_footer
      %s21 = sadd.s32 1, %s17
    $region7: #{tpu_custom_call.1} parent=1 // loop_footer_branch
      %16 = sbr.rel target = $region3
    $region8: #{tpu_custom_call.1} parent=1 // loop_exit
      _
    %493 = vsyncpa [#allocation3], 1
    %s494 = scalar_lea.sflag [#allocation3], 1
    %495 = vsyncpa %s494, 1
    %496 = vsyncpa [#allocation6], 1
    %497 = vsyncpa [#allocation4], 1
    %s498 = scalar_lea.sflag [#allocation4], 1
    %499 = vsyncpa %s498, 1
    %500 = vsyncpa [#allocation10], 1

</llo_original>
